<compile_context>
chip_gen: v7x
topology: tpu7x:2x2x1
jax: 0.10.0
libtpu: 0.0.40
codegen_flags: <defaults>
</compile_context>

<pallas_src>
import functools

import jax
import jax.numpy as jnp
from jax import lax
from jax.experimental import pallas as pl
from jax.experimental.pallas import tpu as pltpu

GAMMA = 2.0            # statically 2.0 -> implemented as q * q (no EUP pow)
ALPHA = 0.25
LANES = 128
SUBLANES = 8
CHUNK_ROWS = 512       # inner-loop chunk: 512*128*4B = 256 KiB per live f32 temp
MAX_BLOCK_ROWS = 4096  # DMA block: 2 MiB/f32 input; x2 inputs x2 buffers = 8 MiB


def _round_up(a, b):
    return ((a + b - 1) // b) * b


def _focal_loss_kernel(x_ref, t_ref, o_ref, *, block_rows, chunk_rows,
                       rows_total, ragged):
    num_chunks = block_rows // chunk_rows
    i = pl.program_id(0)

    def chunk_partial(c, masked):
        if num_chunks == 1:
            x = x_ref[...]
            t = t_ref[...]
        else:
            start = pl.multiple_of(c * chunk_rows, chunk_rows)
            x = x_ref[pl.ds(start, chunk_rows), :]
            t = t_ref[pl.ds(start, chunk_rows), :]
        x = x.astype(jnp.float32)
        t = t.astype(jnp.float32)
        if masked:
            # Row-granular validity mask (no int32 element-index overflow).
            row = lax.broadcasted_iota(jnp.int32, (chunk_rows, LANES), 0)
            grow = i * block_rows + c * chunk_rows + row
            mask = grow < rows_total
            # Sanitize first (padded region may hold Inf/NaN), select after.
            x = jnp.where(mask, x, 0.0)
            t = jnp.where(mask, t, 0.0)
        # Numerically stable BCE-with-logits (matches PyTorch):
        #   bce = max(x, 0) - x*t + log1p(exp(-|x|))
        bce = jnp.maximum(x, 0.0) - x * t + jnp.log1p(jnp.exp(-jnp.abs(x)))
        pt = jnp.exp(-bce)
        q = 1.0 - pt
        focal = (q * q) * bce            # alpha hoisted to the wrapper
        if masked:
            focal = jnp.where(mask, focal, 0.0)
        # Cheap sublane reduction to one (8,128) vreg; lane reduce in wrapper.
        return jnp.sum(
            focal.reshape(chunk_rows // SUBLANES, SUBLANES, LANES), axis=0)

    def compute(masked):
        acc0 = jnp.zeros((SUBLANES, LANES), jnp.float32)
        if num_chunks == 1:
            acc = acc0 + chunk_partial(0, masked)
        else:
            acc = lax.fori_loop(
                0, num_chunks,
                lambda c, a: a + chunk_partial(c, masked),
                acc0, unroll=2)
        o_ref[...] = acc[None]

    if ragged:
        last = pl.num_programs(0) - 1

        @pl.when(i == last)
        def _():
            compute(True)

        @pl.when(i < last)
        def _():
            compute(False)
    else:
        compute(False)


def focal_loss(inputs, targets):
    """Binary focal loss with logits, reduction='mean'. Matches the PyTorch module."""
    assert inputs.shape == targets.shape
    n = inputs.size

    x = inputs.reshape(-1)
    t = targets.reshape(-1)

    n_main = (n // LANES) * LANES
    total = jnp.float32(0.0)

    if n_main > 0:
        # 128-aligned prefix: pure (free) reshape when n % 128 == 0; otherwise
        # only the prefix slice is taken -- no whole-array pad / copy.
        # TODO(synk): verify in HLO that the prefix slice does not materialize.
        xm = (x if n_main == n else x[:n_main]).reshape(n_main // LANES, LANES)
        tm = (t if n_main == n else t[:n_main]).reshape(n_main // LANES, LANES)
        rows = n_main // LANES

        if rows > 2 * CHUNK_ROWS:
            # Large inputs: big DMA blocks, >=2 grid steps (keeps both v7x TCs
            # busy), block_rows a multiple of CHUNK_ROWS so chunks divide evenly.
            block_rows = min(MAX_BLOCK_ROWS,
                             _round_up(pl.cdiv(rows, 2), CHUNK_ROWS))
        elif rows >= 2 * SUBLANES:
            block_rows = _round_up(pl.cdiv(rows, 2), SUBLANES)
        else:
            block_rows = _round_up(rows, SUBLANES)

        if block_rows > CHUNK_ROWS and block_rows % CHUNK_ROWS == 0:
            chunk_rows = CHUNK_ROWS
        else:
            chunk_rows = block_rows

        grid = pl.cdiv(rows, block_rows)
        ragged = (rows % block_rows) != 0   # only the last block can be partial

        kernel = functools.partial(
            _focal_loss_kernel, block_rows=block_rows, chunk_rows=chunk_rows,
            rows_total=rows, ragged=ragged)

        partials = pl.pallas_call(
            kernel,
            out_shape=jax.ShapeDtypeStruct((grid, SUBLANES, LANES), jnp.float32),
            grid_spec=pltpu.PrefetchScalarGridSpec(
                num_scalar_prefetch=0,
                grid=(grid,),
                in_specs=[
                    pl.BlockSpec((block_rows, LANES), lambda i: (i, 0)),
                    pl.BlockSpec((block_rows, LANES), lambda i: (i, 0)),
                ],
                out_specs=pl.BlockSpec((1, SUBLANES, LANES),
                                       lambda i: (i, 0, 0)),
            ),
            compiler_params=pltpu.CompilerParams(
                dimension_semantics=("parallel",),  # independent blocks
            ),
        )(xm, tm)
        total = total + jnp.sum(partials)

    if n_main < n:
        # <=127-element ragged tail: negligible work, plain jnp in the wrapper.
        xt = x[n_main:].astype(jnp.float32)
        tt = t[n_main:].astype(jnp.float32)
        bce = jnp.maximum(xt, 0.0) - xt * tt + jnp.log1p(jnp.exp(-jnp.abs(xt)))
        q = 1.0 - jnp.exp(-bce)
        total = total + jnp.sum(q * q * bce)

    # reduction='mean', with alpha hoisted out of the kernel.
    return total * jnp.float32(ALPHA / n)


def _focal_loss_ref(inputs, targets):
    x = inputs.astype(jnp.float32).reshape(-1)
    t = targets.astype(jnp.float32).reshape(-1)
    bce = jnp.maximum(x, 0.0) - x * t + jnp.log1p(jnp.exp(-jnp.abs(x)))
    pt = jnp.exp(-bce)
    return jnp.mean(ALPHA * (1.0 - pt) ** GAMMA * bce)


if __name__ == "__main__":
    key = jax.random.PRNGKey(0)
    shapes = [
        (2, 4, 16, 16),    # 2048 elems: multi-block path, no ragged tail
        (3, 5, 7, 11),     # 1155 elems: partial last block + wrapper tail
        (1, 4, 192, 192),  # 147456 elems: multi-chunk fori_loop + ragged block
    ]
    primary = None
    for shp in shapes:
        key, k1, k2 = jax.random.split(key, 3)
        xs = jax.random.normal(k1, shp, dtype=jnp.float32)
        ts = (jax.random.uniform(k2, shp) > 0.5).astype(jnp.float32)
        out = focal_loss(xs, ts)
        jax.block_until_ready(out)
        ref = _focal_loss_ref(xs, ts)
        assert jnp.allclose(out, ref, rtol=1e-5, atol=1e-6), (shp, out, ref)
        if primary is None:
            primary = out
    print("KERNEL_OK")
</pallas_src>

<mosaic_0001>
module attributes {stable_mosaic.version = 11 : i64} {
  func.func @_focal_loss_kernel(%arg0: i32, %arg1: memref<8x128xf32, #tpu.memory_space<vmem>>, %arg2: memref<8x128xf32, #tpu.memory_space<vmem>>, %arg3: memref<1x8x128xf32, #tpu.memory_space<vmem>>) attributes {dimension_semantics = [#tpu.dimension_semantics<parallel>], iteration_bounds = array<i64: 2>, scalar_prefetch = 0 : i64, scratch_operands = 0 : i64, tpu.core_type = #tpu.core_type<tc>, window_params = [{transform_indices = @transform_0, window_bounds = array<i64: 8, 128>}, {transform_indices = @transform_1, window_bounds = array<i64: 8, 128>}, {transform_indices = @transform_2, window_bounds = array<i64: 1, 8, 128>}]} {
    %cst = arith.constant 0.000000e+00 : f32
    %0 = vector.broadcast %cst : f32 to vector<8x128xf32>
    %c0 = arith.constant 0 : index
    %c0_0 = arith.constant 0 : index
    %1 = vector.load %arg1[%c0, %c0_0] : memref<8x128xf32, #tpu.memory_space<vmem>>, vector<8x128xf32>
    %c0_1 = arith.constant 0 : index
    %c0_2 = arith.constant 0 : index
    %2 = vector.load %arg2[%c0_1, %c0_2] : memref<8x128xf32, #tpu.memory_space<vmem>>, vector<8x128xf32>
    %cst_3 = arith.constant 0.000000e+00 : f32
    %3 = vector.broadcast %cst_3 : f32 to vector<8x128xf32>
    %4 = arith.maximumf %1, %3 : vector<8x128xf32>
    %5 = arith.mulf %1, %2 : vector<8x128xf32>
    %6 = arith.subf %4, %5 : vector<8x128xf32>
    %7 = math.absf %1 : vector<8x128xf32>
    %cst_4 = arith.constant 0.000000e+00 : f32
    %8 = vector.broadcast %cst_4 : f32 to vector<8x128xf32>
    %9 = arith.subf %8, %7 : vector<8x128xf32>
    %10 = math.exp %9 : vector<8x128xf32>
    %11 = math.log1p %10 : vector<8x128xf32>
    %12 = arith.addf %6, %11 : vector<8x128xf32>
    %cst_5 = arith.constant 0.000000e+00 : f32
    %13 = vector.broadcast %cst_5 : f32 to vector<8x128xf32>
    %14 = arith.subf %13, %12 : vector<8x128xf32>
    %15 = math.exp %14 : vector<8x128xf32>
    %cst_6 = arith.constant 1.000000e+00 : f32
    %16 = vector.broadcast %cst_6 : f32 to vector<8x128xf32>
    %17 = arith.subf %16, %15 : vector<8x128xf32>
    %18 = arith.mulf %17, %17 : vector<8x128xf32>
    %19 = arith.mulf %18, %12 : vector<8x128xf32>
    %20 = vector.shape_cast %19 : vector<8x128xf32> to vector<1x8x128xf32>
    %cst_7 = arith.constant dense<0.000000e+00> : vector<8x128xf32>
    %21 = vector.multi_reduction <add>, %20, %cst_7 [0] : vector<1x8x128xf32> to vector<8x128xf32>
    %22 = arith.addf %0, %21 : vector<8x128xf32>
    %23 = vector.shape_cast %22 : vector<8x128xf32> to vector<1x8x128xf32>
    %c0_8 = arith.constant 0 : index
    %c0_9 = arith.constant 0 : index
    %c0_10 = arith.constant 0 : index
    %24 = vector.load %arg3[%c0_8, %c0_9, %c0_10] : memref<1x8x128xf32, #tpu.memory_space<vmem>>, vector<1x8x128xf32>
    tpu.vector_store %arg3[%c0_8, %c0_9, %c0_10], %23 {strides = array<i32>} : memref<1x8x128xf32, #tpu.memory_space<vmem>>, vector<1x8x128xf32>,
    return
  }
  func.func @transform_0(%arg0: i32) -> (i32, i32) {
    %c0_i32 = arith.constant 0 : i32
    %c0_i32_0 = arith.constant 0 : i32
    return %arg0, %c0_i32 : i32, i32
  }
  func.func @transform_1(%arg0: i32) -> (i32, i32) {
    %c0_i32 = arith.constant 0 : i32
    %c0_i32_0 = arith.constant 0 : i32
    return %arg0, %c0_i32 : i32, i32
  }
  func.func @transform_2(%arg0: i32) -> (i32, i32, i32) {
    %c0_i32 = arith.constant 0 : i32
    %c0_i32_0 = arith.constant 0 : i32
    %c0_i32_1 = arith.constant 0 : i32
    return %arg0, %c0_i32, %c0_i32_0 : i32, i32, i32
  }
}

</mosaic_0001>

<llo_original>
// kernel: tpu_custom_call.1
$region0: #{tpu_custom_call.1}
  #allocation0 [shape = 'u32[]', space=smem, size = 0x4, offset = 0x4, fixed_abs, tag = 'smem constant byte address 0x4 - core index']
  #allocation1 [shape = 'u32[144,128]{1,0:T(1,128)}', space=vmem, size = 0x12000, scoped, tag = 'internal scratch']
  %s0 = inlined_call_operand.hbm [shape: f32[16,128], index: 0, kind: input, shape index: {}]
  %s1 = inlined_call_operand.hbm [shape: f32[16,128], index: 1, kind: input, shape index: {}]
  %s2 = inlined_call_operand.hbm [shape: f32[2,8,128], index: 2, kind: output, shape index: {}]
  %s3 = sld [smem:[#allocation0]]
  $region49: #{tpu_custom_call.1} parent=0
    _
  %s5 = ssub.s32 1, %s3
  %s6 = scalar_select 0, %s5, %s3
  $region1: #{tpu_custom_call.1} parent=0
    #allocation2 [shape = 'u8[8192]{0}', space=vmem, size = 0x2000, scoped, tag = 'input window, operand 0']
    #allocation3 [shape = 's32[2]{0}', space=sflag, size = 0x8, scoped, tag = 'scoped memory for tpu_custom_call.1']
    #allocation4 [shape = 's32[2]{0}', space=sflag, size = 0x8, scoped, tag = 'scoped memory for tpu_custom_call.1']
    #allocation5 [shape = 'u8[8192]{0}', space=vmem, size = 0x2000, scoped, tag = 'input window, operand 1']
    #allocation6 [shape = 's32[2]{0}', space=sflag, size = 0x8, scoped, tag = 'scoped memory for tpu_custom_call.1']
    #allocation7 [shape = 'u8[8192]{0}', space=vmem, size = 0x2000, scoped, tag = 'output window, operand 0']
    %7 = vsyncpa [#allocation3], 0
    %s8 = scalar_lea.sflag [#allocation3], 1
    %9 = vsyncpa %s8, 0
    %10 = vsyncpa [#allocation6], 0
    %s11 = scalar_lea.sflag [#allocation6], 1
    %12 = vsyncpa %s11, 0
    %13 = vsyncpa [#allocation4], 0
    %s14 = scalar_lea.sflag [#allocation4], 1
    %15 = vsyncpa %s14, 0
    loop: start=0, step=1, limit=4
    $region2: #{tpu_custom_call.1} parent=1 // loop_pre_header
      _
    $region3: #{tpu_custom_call.1} parent=1 // loop_header
      %s17 = sphi 0, %s21
      %p18 = scmp.ge.s32.totalorder %s17, 4
      %s27 = sphi 0, %s29
      %s30 = sphi 0, %s27
      %s31 = sphi 0, %s30
      %s47 = sphi 0, %s31
      %s53 = sphi 0, %s55
      %s56 = sphi 0, %s53
      %s57 = sphi 0, %s56
      %s73 = sphi 0, %s57
      %s79 = sphi 0, %s81
      %s82 = sphi 0, %s79
      %s83 = sphi 0, %s82
      %s99 = sphi 0, %s83
    $region4: #{tpu_custom_call.1} parent=1 // loop_header_branch
      %20 = sbr.rel (%p18) target = $region8
    $region5: #{tpu_custom_call.1} parent=1 // loop_body
      %s22 = ssub.s32 %s17, 1
      %s23 = ssub.s32 %s17, 2
      %s24 = sadd.s32 %s17, 1
      %s25 = ssub.s32 %s17, %s24
      %p26 = scmp.eq.s32.totalorder %s25, 0
      %s28 = sadd.s32 %s27, 1
      %s29 = scalar_select %p26, %s27, %s28
      %p32 = pneg %p26
      %p33 = scmp.eq.s32.totalorder %s17, 1
      %p34 = por %p32, %p33
      %p35 = scmp.ne.s32.totalorder %s27, %s30
      %p36 = scmp.eq.s32.totalorder %s17, 0
      %p37 = por %p35, %p36
      %p38 = scmp.ne.s32.totalorder %s27, %s30
      %p39 = scmp.eq.s32.totalorder %s22, 1
      %p40 = por %p38, %p39
      %p41 = scmp.ne.s32.totalorder %s30, %s31
      %p42 = scmp.eq.s32.totalorder %s22, 0
      %p43 = por %p41, %p42
      %p44 = scmp.ne.s32.totalorder %s30, %s31
      %p45 = scmp.eq.s32.totalorder %s23, 1
      %p46 = por %p44, %p45
      %p48 = scmp.ne.s32.totalorder %s31, %s47
      %p49 = scmp.eq.s32.totalorder %s23, 0
      %p50 = por %p48, %p49
      %s51 = ssub.s32 %s17, %s24
      %p52 = scmp.eq.s32.totalorder %s51, 0
      %s54 = sadd.s32 %s53, 1
      %s55 = scalar_select %p52, %s53, %s54
      %p58 = pneg %p52
      %p59 = scmp.eq.s32.totalorder %s17, 1
      %p60 = por %p58, %p59
      %p61 = scmp.ne.s32.totalorder %s53, %s56
      %p62 = scmp.eq.s32.totalorder %s17, 0
      %p63 = por %p61, %p62
      %p64 = scmp.ne.s32.totalorder %s53, %s56
      %p65 = scmp.eq.s32.totalorder %s22, 1
      %p66 = por %p64, %p65
      %p67 = scmp.ne.s32.totalorder %s56, %s57
      %p68 = scmp.eq.s32.totalorder %s22, 0
      %p69 = por %p67, %p68
      %p70 = scmp.ne.s32.totalorder %s56, %s57
      %p71 = scmp.eq.s32.totalorder %s23, 1
      %p72 = por %p70, %p71
      %p74 = scmp.ne.s32.totalorder %s57, %s73
      %p75 = scmp.eq.s32.totalorder %s23, 0
      %p76 = por %p74, %p75
      %s77 = ssub.s32 %s17, %s24
      %p78 = scmp.eq.s32.totalorder %s77, 0
      %s80 = sadd.s32 %s79, 1
      %s81 = scalar_select %p78, %s79, %s80
      %p84 = pneg %p78
      %p85 = scmp.eq.s32.totalorder %s17, 1
      %p86 = por %p84, %p85
      %p87 = scmp.ne.s32.totalorder %s79, %s82
      %p88 = scmp.eq.s32.totalorder %s17, 0
      %p89 = por %p87, %p88
      %p90 = scmp.ne.s32.totalorder %s79, %s82
      %p91 = scmp.eq.s32.totalorder %s22, 1
      %p92 = por %p90, %p91
      %p93 = scmp.ne.s32.totalorder %s82, %s83
      %p94 = scmp.eq.s32.totalorder %s22, 0
      %p95 = por %p93, %p94
      %p96 = scmp.ne.s32.totalorder %s82, %s83
      %p97 = scmp.eq.s32.totalorder %s23, 1
      %p98 = por %p96, %p97
      %p100 = scmp.ne.s32.totalorder %s83, %s99
      %p101 = scmp.eq.s32.totalorder %s23, 0
      %p102 = por %p100, %p101
      %p103 = scmp.le.s32.totalorder 1, %s17
      %p104 = scmp.lt.s32.totalorder %s17, 3
      %p105 = pnand %p103, %p104
      %p106 = pneg %p105
      // Predicated region
      $region9: #{tpu_custom_call.1} parent=5 // pred_check
        _
      $region10: #{tpu_custom_call.1} parent=5 // pred_check_branch
        %108 = sbr.rel (%p105) target = $region12
      $region11: #{tpu_custom_call.1} parent=5 // pred_region
        %s109 = ssub.s32 %s17, 1
      $region12: #{tpu_custom_call.1} parent=5 // pred_fallthru
        _
      %p110 = scmp.lt.s32.totalorder %s17, 2
      // Predicated region
      $region13: #{tpu_custom_call.1} parent=5 // pred_check
        %p111 = pneg %p110
      $region14: #{tpu_custom_call.1} parent=5 // pred_check_branch
        %113 = sbr.rel (%p111) target = $region16
      $region15: #{tpu_custom_call.1} parent=5 // pred_region
        // Predicated region
        $region17: #{tpu_custom_call.1} parent=15 // pred_check
          %p114 = pneg %p37
        $region18: #{tpu_custom_call.1} parent=15 // pred_check_branch
          %116 = sbr.rel (%p114) target = $region20
        $region19: #{tpu_custom_call.1} parent=15 // pred_region
          %s117 = sand.u32 %s27, 1
          %s118 = scalar_lea.sflag [#allocation3], %s117
          %s119 = sand.u32 %s27, 1
          %s120 = smul.addr %s119, 8
          %s121 = scalar_lea.vmem [#allocation2], %s120
          %s123 = ssub.s32 128, 128
          %124 = vsyncadd %s118, %s123
          %s125 = smul.addr %s17, 128
          %s126 = scalar_lea.hbm %s0, %s125
          %s128 = sshll.u32 %s121, 4
          %s129 = int_to_ptr.vmem [resolvable:$true] %s128
          %131 = dma.hbm_to_vmem [thread:$0]  %s126, 128, %s129, %s118
        $region20: #{tpu_custom_call.1} parent=15 // pred_fallthru
          _
        // Predicated region
        $region21: #{tpu_custom_call.1} parent=15 // pred_check
          %p132 = pneg %p63
        $region22: #{tpu_custom_call.1} parent=15 // pred_check_branch
          %134 = sbr.rel (%p132) target = $region24
        $region23: #{tpu_custom_call.1} parent=15 // pred_region
          %s135 = sand.u32 %s53, 1
          %s136 = scalar_lea.sflag [#allocation6], %s135
          %s137 = sand.u32 %s53, 1
          %s138 = smul.addr %s137, 8
          %s139 = scalar_lea.vmem [#allocation5], %s138
          %s141 = ssub.s32 128, 128
          %142 = vsyncadd %s136, %s141
          %s143 = smul.addr %s17, 128
          %s144 = scalar_lea.hbm %s1, %s143
          %s146 = sshll.u32 %s139, 4
          %s147 = int_to_ptr.vmem [resolvable:$true] %s146
          %149 = dma.hbm_to_vmem [thread:$0]  %s144, 128, %s147, %s136
        $region24: #{tpu_custom_call.1} parent=15 // pred_fallthru
          _
      $region16: #{tpu_custom_call.1} parent=5 // pred_fallthru
        _
      %p150 = scmp.le.s32.totalorder 1, %s17
      %p151 = scmp.lt.s32.totalorder %s17, 3
      %p152 = pnand %p150, %p151
      %p153 = pneg %p152
      // Predicated region
      $region25: #{tpu_custom_call.1} parent=5 // pred_check
        _
      $region26: #{tpu_custom_call.1} parent=5 // pred_check_branch
        %155 = sbr.rel (%p152) target = $region28
      $region27: #{tpu_custom_call.1} parent=5 // pred_region
        %s156 = ssub.s32 %s17, 1
        %s157 = sand.u32 %s30, 1
        %s158 = scalar_lea.sflag [#allocation3], %s157
        %s159 = sand.u32 %s30, 1
        %s160 = smul.addr %s159, 8
        %s161 = scalar_lea.vmem [#allocation2], %s160
        // Predicated region
        $region29: #{tpu_custom_call.1} parent=27 // pred_check
          %p162 = pneg %p43
        $region30: #{tpu_custom_call.1} parent=27 // pred_check_branch
          %164 = sbr.rel (%p162) target = $region32
        $region31: #{tpu_custom_call.1} parent=27 // pred_region
          %165 = dma.done %s158, 128
        $region32: #{tpu_custom_call.1} parent=27 // pred_fallthru
          _
        %s166 = sand.u32 %s56, 1
        %s167 = scalar_lea.sflag [#allocation6], %s166
        %s168 = sand.u32 %s56, 1
        %s169 = smul.addr %s168, 8
        %s170 = scalar_lea.vmem [#allocation5], %s169
        // Predicated region
        $region33: #{tpu_custom_call.1} parent=27 // pred_check
          %p171 = pneg %p69
        $region34: #{tpu_custom_call.1} parent=27 // pred_check_branch
          %173 = sbr.rel (%p171) target = $region36
        $region35: #{tpu_custom_call.1} parent=27 // pred_region
          %174 = dma.done %s167, 128
        $region36: #{tpu_custom_call.1} parent=27 // pred_fallthru
          _
        %s175 = sand.u32 %s30, 1
        %s176 = scalar_lea.sflag [#allocation3], %s175
        %s177 = sand.u32 %s30, 1
        %s178 = smul.addr %s177, 8
        %s179 = scalar_lea.vmem [#allocation2], %s178
        %p180 = pneg %p43
        %p181 = pneg %p40
        %s182 = sand.u32 %s56, 1
        %s183 = scalar_lea.sflag [#allocation6], %s182
        %s184 = sand.u32 %s56, 1
        %s185 = smul.addr %s184, 8
        %s186 = scalar_lea.vmem [#allocation5], %s185
        %p187 = pneg %p69
        %p188 = pneg %p66
        %p189 = pneg %p95
        %p190 = pneg %p92
        %s191 = sand.u32 %s82, 1
        %s192 = scalar_lea.sflag [#allocation4], %s191
        %s193 = sand.u32 %s82, 1
        %s194 = smul.addr %s193, 8
        %s195 = scalar_lea.vmem [#allocation7], %s194
        %v196 = vld [vmem:[%s161] sm:$0xff]
        %v197 = vld [vmem:[%s170] sm:$0xff]
        %v198 = vmax.f32 %v196, 0.0
        %v199 = vmul.f32 %v196, %v197
        %v200 = vsub.f32 %v198, %v199
        %v201 = vand.u32 2147483647, %v196
        %v202 = vsub.f32 0.0, %v201
        %v203 = vmul.f32 %v202, 1.442695
        %v204 = vpow.pop %v203
        %v205 = vadd.f32 %v204, 1.0
        %v206 = vlog2.pop %v205
        %v207 = vmul.f32 %v206, 0.6931472
        %v208 = vmul.f32 -0.5, %v204
        %v209 = vadd.f32 %v208, 1.0
        %v210 = vmul.f32 %v209, %v204
        %v211 = vand.u32 2147483647, %v204
        %vm212 = vcmp.lt.f32.partialorder %v211, 0.0004427343
        %v213 = vsel %vm212, %v210, %v207
        %v214 = vadd.f32 %v200, %v213
        %v215 = vsub.f32 0.0, %v214
        %v216 = vmul.f32 %v215, 1.442695
        %v217 = vpow.pop %v216
        %v218 = vsub.f32 1.0, %v217
        %v219 = vmul.f32 %v218, %v218
        %v220 = vmul.f32 %v219, %v214
        %v221 = vadd.f32 %v220, 0.0
        %v222 = vadd.f32 %v221, 0.0
        %223 = vst [vmem:[%s195] sm:$0xff] %v222
        %s224 = sand.u32 %s82, 1
        %s225 = scalar_lea.sflag [#allocation4], %s224
        %s226 = sand.u32 %s82, 1
        %s227 = smul.addr %s226, 8
        %s228 = scalar_lea.vmem [#allocation7], %s227
        // Predicated region
        $region37: #{tpu_custom_call.1} parent=27 // pred_check
          %p229 = pneg %p92
        $region38: #{tpu_custom_call.1} parent=27 // pred_check_branch
          %231 = sbr.rel (%p229) target = $region40
        $region39: #{tpu_custom_call.1} parent=27 // pred_region
          %s233 = ssub.s32 128, 128
          %234 = vsyncadd %s225, %s233
          %s235 = smul.addr %s22, 128
          %s236 = scalar_lea.hbm %s2, %s235
          %s238 = sshll.u32 %s228, 4
          %s239 = int_to_ptr.vmem [resolvable:$true] %s238
          %241 = dma.vmem_to_hbm [thread:$0]  %s239, 128, %s236, %s225
        $region40: #{tpu_custom_call.1} parent=27 // pred_fallthru
          _
      $region28: #{tpu_custom_call.1} parent=5 // pred_fallthru
        _
      %p242 = scmp.le.s32.totalorder 2, %s17
      // Predicated region
      $region41: #{tpu_custom_call.1} parent=5 // pred_check
        %p243 = pneg %p242
      $region42: #{tpu_custom_call.1} parent=5 // pred_check_branch
        %245 = sbr.rel (%p243) target = $region44
      $region43: #{tpu_custom_call.1} parent=5 // pred_region
        %s246 = ssub.s32 %s17, 2
        // Predicated region
        $region45: #{tpu_custom_call.1} parent=43 // pred_check
          %p247 = pneg %p98
        $region46: #{tpu_custom_call.1} parent=43 // pred_check_branch
          %249 = sbr.rel (%p247) target = $region48
        $region47: #{tpu_custom_call.1} parent=43 // pred_region
          %s250 = sand.u32 %s83, 1
          %s251 = scalar_lea.sflag [#allocation4], %s250
          %s252 = sand.u32 %s83, 1
          %s253 = smul.addr %s252, 8
          %s254 = scalar_lea.vmem [#allocation7], %s253
          %255 = dma.done %s251, 128
        $region48: #{tpu_custom_call.1} parent=43 // pred_fallthru
          _
      $region44: #{tpu_custom_call.1} parent=5 // pred_fallthru
        _
    $region6: #{tpu_custom_call.1} parent=1 // loop_footer
      %s21 = sadd.s32 1, %s17
    $region7: #{tpu_custom_call.1} parent=1 // loop_footer_branch
      %16 = sbr.rel target = $region3
    $region8: #{tpu_custom_call.1} parent=1 // loop_exit
      _
    %256 = vsyncpa [#allocation3], 1
    %s257 = scalar_lea.sflag [#allocation3], 1
    %258 = vsyncpa %s257, 1
    %259 = vsyncpa [#allocation6], 1
    %s260 = scalar_lea.sflag [#allocation6], 1
    %261 = vsyncpa %s260, 1
    %262 = vsyncpa [#allocation4], 1
    %s263 = scalar_lea.sflag [#allocation4], 1
    %264 = vsyncpa %s263, 1

</llo_original>
